<compile_context>
chip_gen: v5e
topology: v5e:2x2
jax: 0.10.0
libtpu: 0.0.40
codegen_flags: <defaults>
</compile_context>

<pallas_src>
import functools

import jax
import jax.numpy as jnp
import numpy as np
from jax import lax
from jax.experimental import pallas as pl
from jax.experimental.pallas import tpu as pltpu


def create_gaussian_kernel_1d(kernel_size: int, cutoff: float) -> np.ndarray:
    """1D gaussian factor, normalized so outer(g1, g1) equals the torch 2D kernel."""
    center = kernel_size // 2
    e = np.array(
        [np.exp(-float((i - center) ** 2) / (2.0 * float(cutoff) ** 2))
         for i in range(kernel_size)],
        dtype=np.float64,
    )
    return e / e.sum()


def _hpf_kernel(x_ref, out_ref, *, g1, pad, W, HW, inv_c, use_roll):
    """x_ref: (nb, C, H*W) block; out_ref: (nb, H*W) block."""
    n_chan = x_ref.shape[1]

    # Channel-by-channel accumulation in f32 (no full-block f32 upcast temp).
    s = x_ref[:, 0, :].astype(jnp.float32)
    for c in range(1, n_chan):
        s = s + x_ref[:, c, :].astype(jnp.float32)

    # Hoisted index plane + column index (built once, outside the tap loops).
    idx = lax.broadcasted_iota(jnp.int32, s.shape, 1)   # flat pixel index in [0, H*W)
    col = idx % W                                       # column within the image

    def gather(a, off):
        # result[..., i] = a[..., i + off]; wrap positions are zeroed by the caller's mask.
        if use_roll:
            return pltpu.roll(a, (-off) % HW, axis=a.ndim - 1)   # XLU rotate
        return jnp.roll(a, -off, axis=a.ndim - 1)                # unaligned fallback

    # Vertical pass: t[i, j] = sum_o g1[pad+o] * s[i+o, j], zero outside the image.
    t = g1[pad] * s
    for o in range(1, pad + 1):
        below = jnp.where(idx < HW - o * W, gather(s, o * W), 0.0)
        above = jnp.where(idx >= o * W, gather(s, -o * W), 0.0)
        t = t + g1[pad + o] * below + g1[pad - o] * above

    # Horizontal pass: conv[i, j] = sum_o g1[pad+o] * t[i, j+o], zero outside the image.
    conv = g1[pad] * t
    for o in range(1, pad + 1):
        right = jnp.where(col < W - o, gather(t, o), 0.0)
        left = jnp.where(col >= o, gather(t, -o), 0.0)
        conv = conv + g1[pad + o] * right + g1[pad - o] * left

    # grayscale - conv  ==  s / C - conv(g, s)
    out_ref[...] = (s * inv_c - conv).astype(out_ref.dtype)


class HighPassFilterPallas:
    """Pallas-TPU port of the torch HighPassFilter module (forward pass)."""

    def __init__(self, cutoff: float, kernel_size: int = 3):
        self.kernel_size = kernel_size
        self.padding = kernel_size // 2
        g1 = create_gaussian_kernel_1d(kernel_size, cutoff)
        self.g1d = tuple(float(v) for v in g1)
        g2 = np.outer(g1, g1).astype(np.float32)
        # torch: stack 3 copies -> conv weight (1, 3, K, K); conv sums over channels.
        self.weights = np.stack([g2, g2, g2], axis=0)  # (3, K, K), for the reference

    @staticmethod
    def _vmem_capacity_bytes() -> int:
        try:
            return int(pltpu.get_tpu_info().vmem_capacity_bytes)
        except Exception:
            return 64 * 1024 * 1024   # v7x per-TC capacity = smallest current gen

    @staticmethod
    def _pick_batch_block(n: int, bytes_per_img: int, target_bytes: int) -> int:
        # Divisors of n whose output block keeps the second-minor dim either full
        # (== n) or a multiple of 8 (sublane tiling constraint on the out spec).
        cands = [d for d in range(1, n + 1) if n % d == 0 and (d % 8 == 0 or d == n)]
        fitting = [d for d in cands if d * bytes_per_img <= target_bytes]
        if not fitting:
            return min(cands)
        nb = max(fitting)
        if n // nb < 2:
            # v7x has 2 TensorCores: prefer >= 2 grid steps when blocks stay >= 1 MiB.
            multi = [d for d in fitting if n // d >= 2 and d * bytes_per_img >= (1 << 20)]
            if multi:
                nb = max(multi)
        return nb

    def _forward_4d(self, x: jax.Array) -> jax.Array:
        N, C, H, W = x.shape
        assert C == 3, "gaussian conv weight is built for 3 input channels"
        HW = H * W
        pad = self.padding

        # Free reshape (trailing contiguous dims): lane-dense H*W last axis.
        x_flat = x.reshape(N, C, HW)

        vmem_cap = self._vmem_capacity_bytes()
        target_in_bytes = min(8 * 1024 * 1024, vmem_cap // 8)
        bytes_per_img = C * HW * x.dtype.itemsize
        nb = self._pick_batch_block(N, bytes_per_img, target_in_bytes)
        grid = (N // nb,)

        # XLU rotate needs an (8, 128)-aligned operand; otherwise fall back to
        # slice-shift rolls (masked identically, so results match).
        use_roll = (HW % 128 == 0) and (nb % 8 == 0)

        kernel = functools.partial(
            _hpf_kernel, g1=self.g1d, pad=pad, W=W, HW=HW, inv_c=1.0 / C,
            use_roll=use_roll)

        # Peak-VMEM estimate: double-buffered in/out blocks + f32 working planes
        # (channel sum, two tap accumulators, gather/select temporaries, masks).
        plane_f32 = nb * HW * 4
        est = (2 * nb * C * HW * x.dtype.itemsize
               + 2 * nb * HW * x.dtype.itemsize
               + 8 * plane_f32)
        vmem_limit = int(min(0.75 * vmem_cap, max(1.25 * est, 32 * 1024 * 1024)))

        out = pl.pallas_call(
            kernel,
            out_shape=jax.ShapeDtypeStruct((N, HW), x.dtype),
            grid_spec=pltpu.PrefetchScalarGridSpec(
                num_scalar_prefetch=0,
                grid=grid,
                in_specs=[pl.BlockSpec((nb, C, HW), lambda b: (b, 0, 0))],
                out_specs=pl.BlockSpec((nb, HW), lambda b: (b, 0)),
            ),
            compiler_params=pltpu.CompilerParams(
                dimension_semantics=("parallel",),
                vmem_limit_bytes=vmem_limit,
            ),
        )(x_flat)
        return out.reshape(N, 1, H, W)   # free reshape back to (N, 1, H, W)

    def __call__(self, x: jax.Array) -> jax.Array:
        if x.ndim == 4:
            return self._forward_4d(x)
        # torch 3D path: unsqueeze(0); (1,1,H,W) gray minus conv broadcasts back to
        # (1,1,H,W) with values identical to the 4D path.
        return self._forward_4d(x[None])


def _reference(x: jax.Array, weights: np.ndarray, pad: int) -> jax.Array:
    x_gray = jnp.mean(x, axis=1, keepdims=True)
    w = jnp.asarray(weights, x.dtype)[None]  # (1, 3, K, K)
    conv = jax.lax.conv_general_dilated(
        x, w, window_strides=(1, 1), padding=[(pad, pad), (pad, pad)],
        dimension_numbers=("NCHW", "OIHW", "NCHW"),
    )
    return x_gray - conv


if __name__ == "__main__":
    key = jax.random.PRNGKey(0)
    k1, k2, k3 = jax.random.split(key, 3)
    hpf = HighPassFilterPallas(cutoff=1.5, kernel_size=3)

    # Small, module-consistent shape (exercises the unaligned fallback-shift path).
    x_small = jax.random.uniform(k1, (2, 3, 16, 16), dtype=jnp.float32)
    out_small = jax.block_until_ready(hpf(x_small))
    assert out_small.shape == (2, 1, 16, 16)
    ref_small = _reference(x_small, hpf.weights, hpf.padding)
    np.testing.assert_allclose(np.asarray(out_small), np.asarray(ref_small),
                               rtol=1e-5, atol=1e-5)

    # Batch of 8 (exercises the (8,128)-aligned pltpu.roll fast path).
    x_big = jax.random.uniform(k2, (8, 3, 16, 16), dtype=jnp.float32)
    out_big = jax.block_until_ready(hpf(x_big))
    ref_big = _reference(x_big, hpf.weights, hpf.padding)
    np.testing.assert_allclose(np.asarray(out_big), np.asarray(ref_big),
                               rtol=1e-5, atol=1e-5)

    # 3-D input path (torch's unsqueeze branch).
    x3 = jax.random.uniform(k3, (3, 16, 16), dtype=jnp.float32)
    out3 = jax.block_until_ready(hpf(x3))
    assert out3.shape == (1, 1, 16, 16)
    ref3 = _reference(x3[None], hpf.weights, hpf.padding)
    np.testing.assert_allclose(np.asarray(out3), np.asarray(ref3),
                               rtol=1e-5, atol=1e-5)

    print("KERNEL_OK")
</pallas_src>

<mosaic_0001>
module attributes {stable_mosaic.version = 11 : i64} {
  func.func @_hpf_kernel(%arg0: i32, %arg1: memref<2x3x256xf32, #tpu.memory_space<vmem>>, %arg2: memref<2x256xf32, #tpu.memory_space<vmem>>) attributes {dimension_semantics = [#tpu.dimension_semantics<parallel>], iteration_bounds = array<i64: 1>, scalar_prefetch = 0 : i64, scratch_operands = 0 : i64, tpu.core_type = #tpu.core_type<tc>, window_params = [{transform_indices = @transform_0, window_bounds = array<i64: 2, 3, 256>}, {transform_indices = @transform_1, window_bounds = array<i64: 2, 256>}]} {
    %c0 = arith.constant 0 : index
    %c0_0 = arith.constant 0 : index
    %c0_1 = arith.constant 0 : index
    %0 = vector.load %arg1[%c0, %c0_0, %c0_1] : memref<2x3x256xf32, #tpu.memory_space<vmem>>, vector<2x1x256xf32>
    %1 = vector.shape_cast %0 : vector<2x1x256xf32> to vector<2x256xf32>
    %c0_2 = arith.constant 0 : index
    %c1 = arith.constant 1 : index
    %c0_3 = arith.constant 0 : index
    %2 = vector.load %arg1[%c0_2, %c1, %c0_3] : memref<2x3x256xf32, #tpu.memory_space<vmem>>, vector<2x1x256xf32>
    %3 = vector.shape_cast %2 : vector<2x1x256xf32> to vector<2x256xf32>
    %4 = arith.addf %1, %3 : vector<2x256xf32>
    %c0_4 = arith.constant 0 : index
    %c2 = arith.constant 2 : index
    %c0_5 = arith.constant 0 : index
    %5 = vector.load %arg1[%c0_4, %c2, %c0_5] : memref<2x3x256xf32, #tpu.memory_space<vmem>>, vector<2x1x256xf32>
    %6 = vector.shape_cast %5 : vector<2x1x256xf32> to vector<2x256xf32>
    %7 = arith.addf %4, %6 : vector<2x256xf32>
    %8 = tpu.iota {dimensions = array<i32: 1>} : vector<2x256xi32>
    %c16_i32 = arith.constant 16 : i32
    %c0_i32 = arith.constant 0 : i32
    %9 = arith.cmpi eq, %c16_i32, %c0_i32 : i32
    %c1_i32 = arith.constant 1 : i32
    %10 = arith.select %9, %c1_i32, %c16_i32 : i32
    %11 = vector.broadcast %10 : i32 to vector<2x256xi32>
    %12 = arith.remsi %8, %11 : vector<2x256xi32>
    %c0_i32_6 = arith.constant 0 : i32
    %13 = vector.broadcast %c0_i32_6 : i32 to vector<2x256xi32>
    %14 = arith.cmpi ne, %12, %13 : vector<2x256xi32>
    %c0_i32_7 = arith.constant 0 : i32
    %15 = vector.broadcast %c0_i32_7 : i32 to vector<2x256xi32>
    %16 = arith.cmpi slt, %12, %15 : vector<2x256xi32>
    %c0_i32_8 = arith.constant 0 : i32
    %17 = arith.cmpi slt, %10, %c0_i32_8 : i32
    %18 = vector.broadcast %17 : i1 to vector<2x256xi1>
    %19 = vector.broadcast %18 : vector<2x256xi1> to vector<2x256xi1>
    %20 = arith.xori %16, %19 : vector<2x256xi1>
    %21 = arith.andi %20, %14 : vector<2x256xi1>
    %22 = vector.broadcast %10 : i32 to vector<2x256xi32>
    %23 = arith.addi %12, %22 : vector<2x256xi32>
    %24 = arith.select %21, %23, %12 : vector<2x256xi1>, vector<2x256xi32>
    %cst = arith.constant 0.384397328 : f32
    %25 = vector.broadcast %cst : f32 to vector<2x256xf32>
    %26 = arith.mulf %25, %7 : vector<2x256xf32>
    %c240_i32 = arith.constant 240 : i32
    %27 = vector.broadcast %c240_i32 : i32 to vector<2x256xi32>
    %28 = arith.cmpi slt, %8, %27 : vector<2x256xi32>
    %29 = vector.extract_strided_slice %7 {offsets = [0, 16], sizes = [2, 240], strides = [1, 1]} : vector<2x256xf32> to vector<2x240xf32>
    %30 = vector.extract_strided_slice %7 {offsets = [0, 0], sizes = [2, 16], strides = [1, 1]} : vector<2x256xf32> to vector<2x16xf32>
    %31 = tpu.concatenate %29, %30 in 1 : vector<2x240xf32>, vector<2x16xf32> -> vector<2x256xf32>
    %cst_9 = arith.constant 0.000000e+00 : f32
    %32 = vector.broadcast %cst_9 : f32 to vector<2x256xf32>
    %33 = arith.select %28, %31, %32 : vector<2x256xi1>, vector<2x256xf32>
    %c16_i32_10 = arith.constant 16 : i32
    %34 = vector.broadcast %c16_i32_10 : i32 to vector<2x256xi32>
    %35 = arith.cmpi sge, %8, %34 : vector<2x256xi32>
    %36 = vector.extract_strided_slice %7 {offsets = [0, 240], sizes = [2, 16], strides = [1, 1]} : vector<2x256xf32> to vector<2x16xf32>
    %37 = vector.extract_strided_slice %7 {offsets = [0, 0], sizes = [2, 240], strides = [1, 1]} : vector<2x256xf32> to vector<2x240xf32>
    %38 = tpu.concatenate %36, %37 in 1 : vector<2x16xf32>, vector<2x240xf32> -> vector<2x256xf32>
    %cst_11 = arith.constant 0.000000e+00 : f32
    %39 = vector.broadcast %cst_11 : f32 to vector<2x256xf32>
    %40 = arith.select %35, %38, %39 : vector<2x256xi1>, vector<2x256xf32>
    %cst_12 = arith.constant 0.307801336 : f32
    %41 = vector.broadcast %cst_12 : f32 to vector<2x256xf32>
    %42 = arith.mulf %41, %33 : vector<2x256xf32>
    %43 = arith.addf %26, %42 : vector<2x256xf32>
    %cst_13 = arith.constant 0.307801336 : f32
    %44 = vector.broadcast %cst_13 : f32 to vector<2x256xf32>
    %45 = arith.mulf %44, %40 : vector<2x256xf32>
    %46 = arith.addf %43, %45 : vector<2x256xf32>
    %cst_14 = arith.constant 0.384397328 : f32
    %47 = vector.broadcast %cst_14 : f32 to vector<2x256xf32>
    %48 = arith.mulf %47, %46 : vector<2x256xf32>
    %c15_i32 = arith.constant 15 : i32
    %49 = vector.broadcast %c15_i32 : i32 to vector<2x256xi32>
    %50 = arith.cmpi slt, %24, %49 : vector<2x256xi32>
    %51 = vector.extract_strided_slice %46 {offsets = [0, 1], sizes = [2, 255], strides = [1, 1]} : vector<2x256xf32> to vector<2x255xf32>
    %52 = vector.extract_strided_slice %46 {offsets = [0, 0], sizes = [2, 1], strides = [1, 1]} : vector<2x256xf32> to vector<2x1xf32>
    %53 = tpu.concatenate %51, %52 in 1 : vector<2x255xf32>, vector<2x1xf32> -> vector<2x256xf32>
    %cst_15 = arith.constant 0.000000e+00 : f32
    %54 = vector.broadcast %cst_15 : f32 to vector<2x256xf32>
    %55 = arith.select %50, %53, %54 : vector<2x256xi1>, vector<2x256xf32>
    %c1_i32_16 = arith.constant 1 : i32
    %56 = vector.broadcast %c1_i32_16 : i32 to vector<2x256xi32>
    %57 = arith.cmpi sge, %24, %56 : vector<2x256xi32>
    %58 = vector.extract_strided_slice %46 {offsets = [0, 255], sizes = [2, 1], strides = [1, 1]} : vector<2x256xf32> to vector<2x1xf32>
    %59 = vector.extract_strided_slice %46 {offsets = [0, 0], sizes = [2, 255], strides = [1, 1]} : vector<2x256xf32> to vector<2x255xf32>
    %60 = tpu.concatenate %58, %59 in 1 : vector<2x1xf32>, vector<2x255xf32> -> vector<2x256xf32>
    %cst_17 = arith.constant 0.000000e+00 : f32
    %61 = vector.broadcast %cst_17 : f32 to vector<2x256xf32>
    %62 = arith.select %57, %60, %61 : vector<2x256xi1>, vector<2x256xf32>
    %cst_18 = arith.constant 0.307801336 : f32
    %63 = vector.broadcast %cst_18 : f32 to vector<2x256xf32>
    %64 = arith.mulf %63, %55 : vector<2x256xf32>
    %65 = arith.addf %48, %64 : vector<2x256xf32>
    %cst_19 = arith.constant 0.307801336 : f32
    %66 = vector.broadcast %cst_19 : f32 to vector<2x256xf32>
    %67 = arith.mulf %66, %62 : vector<2x256xf32>
    %68 = arith.addf %65, %67 : vector<2x256xf32>
    %cst_20 = arith.constant 0.333333343 : f32
    %69 = vector.broadcast %cst_20 : f32 to vector<2x256xf32>
    %70 = arith.mulf %7, %69 : vector<2x256xf32>
    %71 = arith.subf %70, %68 : vector<2x256xf32>
    %c0_21 = arith.constant 0 : index
    %c0_22 = arith.constant 0 : index
    %72 = vector.load %arg2[%c0_21, %c0_22] : memref<2x256xf32, #tpu.memory_space<vmem>>, vector<2x256xf32>
    tpu.vector_store %arg2[%c0_21, %c0_22], %71 {strides = array<i32>} : memref<2x256xf32, #tpu.memory_space<vmem>>, vector<2x256xf32>,
    return
  }
  func.func @transform_0(%arg0: i32) -> (i32, i32, i32) {
    %c0_i32 = arith.constant 0 : i32
    %c0_i32_0 = arith.constant 0 : i32
    %c0_i32_1 = arith.constant 0 : i32
    return %arg0, %c0_i32, %c0_i32_0 : i32, i32, i32
  }
  func.func @transform_1(%arg0: i32) -> (i32, i32) {
    %c0_i32 = arith.constant 0 : i32
    %c0_i32_0 = arith.constant 0 : i32
    return %arg0, %c0_i32 : i32, i32
  }
}

</mosaic_0001>

<llo_original>
// kernel: tpu_custom_call.1
$region0: #{tpu_custom_call.1}
  #allocation0 [shape = 'u32[]', space=smem, size = 0x4, offset = 0x4, fixed_abs, tag = 'smem constant byte address 0x4 - core index']
  #allocation1 [shape = 'u32[72,128]{1,0:T(1,128)}', space=vmem, size = 0x9000, scoped, tag = 'internal scratch']
  %s0 = inlined_call_operand.vmem [shape: f32[2,3,256], index: 0, kind: input, shape index: {}]
  %s1 = inlined_call_operand.hbm [shape: f32[2,256], index: 1, kind: output, shape index: {}]
  %s2 = sld [smem:[#allocation0]]
  $region14: #{tpu_custom_call.1} parent=0
    _
  %s4 = ssub.s32 1, %s2
  %s5 = scalar_select 0, %s4, %s2
  $region1: #{tpu_custom_call.1} parent=0
    #allocation2 [shape = 'u8[2048]{0}', space=vmem, size = 0x800, scoped, tag = 'output window, operand 0, single buffered']
    #allocation3 [shape = 's32[1]{0}', space=sflag, size = 0x4, scoped, tag = 'scoped memory for tpu_custom_call.1']
    %6 = vsyncpa [#allocation3], 0
    // Predicated region
    $region2: #{tpu_custom_call.1} parent=1 // pred_check
      _
    $region3: #{tpu_custom_call.1} parent=1 // pred_check_branch
      %8 = sbr.rel (0) target = $region5
    $region4: #{tpu_custom_call.1} parent=1 // pred_region
      _
    $region5: #{tpu_custom_call.1} parent=1 // pred_fallthru
      _
    %v9 = vld [vmem:[%s0] ss:$4 sm:$0x3]
    %s10 = scalar_lea.vmem %s0, 8
    %v11 = vld [vmem:[%s10] ss:$4 sm:$0x3]
    %s12 = scalar_lea.vmem %s0, 1
    %v13 = vld [vmem:[%s12] ss:$4 sm:$0x3]
    %s14 = scalar_lea.vmem %s0, 9
    %v15 = vld [vmem:[%s14] ss:$4 sm:$0x3]
    %v16 = vadd.f32 %v9, %v13
    %v17 = vadd.f32 %v11, %v15
    %s18 = scalar_lea.vmem %s0, 2
    %v19 = vld [vmem:[%s18] ss:$4 sm:$0x3]
    %s20 = scalar_lea.vmem %s0, 10
    %v21 = vld [vmem:[%s20] ss:$4 sm:$0x3]
    %v22 = vadd.f32 %v16, %v19
    %v23 = vadd.f32 %v17, %v21
    %v24 = vlaneseq
    %v25 = vand.u32 %v24, 127
    %v26 = vadd.s32 %v25, 128
    %vm27 = vcmp.lt.s32.totalorder %v25, 0
    %v28 = vsub.s32 0, %v25
    %v29 = vsel %vm27, %v28, %v25
    %v30 = vshrl.u32 %v29, 4
    %v31 = vand.u32 %v29, 15
    %v32 = vsub.s32 0, %v31
    %v33 = vsel %vm27, %v32, %v31
    %vm34 = vcmp.lt.s32.totalorder %v26, 0
    %v35 = vsub.s32 0, %v26
    %v36 = vsel %vm34, %v35, %v26
    %v37 = vshrl.u32 %v36, 4
    %v38 = vand.u32 %v36, 15
    %v39 = vsub.s32 0, %v38
    %v40 = vsel %vm34, %v39, %v38
    %vm41 = vcmp.ne.s32.totalorder %v33, 0
    %vm42 = vcmp.ne.s32.totalorder %v40, 0
    %vm43 = vcmp.lt.s32.totalorder %v33, 0
    %vm44 = vcmp.lt.s32.totalorder %v40, 0
    %vm45 = vmand %vm43, %vm41
    %vm46 = vmand %vm44, %vm42
    %v47 = vadd.s32 %v33, 16
    %v48 = vadd.s32 %v40, 16
    %v49 = vsel %vm45, %v47, %v33
    %v50 = vsel %vm46, %v48, %v40
    %v51 = vmul.f32 %v22, 0.38439733
    %v52 = vmul.f32 %v23, 0.38439733
    %vm53 = vcmp.lt.s32.totalorder %v25, 240
    %vm54 = vcmp.lt.s32.totalorder %v26, 240
    %57 = vst [vmem:[#allocation1] ss:$9 sm:$0xff] %v22
    %s58 = scalar_lea.vmem [#allocation1], 1
    %59 = vst [vmem:[%s58] ss:$9 sm:$0xff] %v23
    %v60 = vld [vmem:[#allocation1] sm:$0xff]
    %v61 = vld [vmem:[#allocation1 + $0x9] sm:$0xff]
    %62 = vrot.lane.b32.xlu0 %v60, 112
    %v63 = vpop.permute.xlu0 %62
    %64 = vrot.lane.b32.xlu0 %v61, 112
    %v65 = vpop.permute.xlu0 %64
    %vm66 = vcmask 916480
    %v67 = vsel %vm66, %v63, %v65
    %70 = vst [vmem:[#allocation1] ss:$9 sm:$0xff] %v22
    %s71 = scalar_lea.vmem [#allocation1], 1
    %72 = vst [vmem:[%s71] ss:$9 sm:$0xff] %v23
    %v73 = vld [vmem:[#allocation1] sm:$0xff]
    %74 = vrot.lane.b32.xlu0 %v73, 112
    %v75 = vpop.permute.xlu0 %74
    %v77 = vsel %vm66, %v65, %v75
    %v78 = vsel %vm53, %v67, 0.0
    %v79 = vsel %vm54, %v77, 0.0
    %vm80 = vcmp.ge.s32.totalorder %v25, 16
    %vm81 = vcmp.ge.s32.totalorder %v26, 16
    %82 = vst [vmem:[#allocation1] ss:$9 sm:$0xff] %v22
    %s83 = scalar_lea.vmem [#allocation1], 1
    %84 = vst [vmem:[%s83] ss:$9 sm:$0xff] %v23
    %v85 = vld [vmem:[#allocation1 + $0x9] sm:$0xff]
    %86 = vrot.lane.b32.xlu0 %v85, 16
    %v87 = vpop.permute.xlu0 %86
    %89 = vst [vmem:[#allocation1] ss:$9 sm:$0xff] %v22
    %s90 = scalar_lea.vmem [#allocation1], 1
    %91 = vst [vmem:[%s90] ss:$9 sm:$0xff] %v23
    %v92 = vld [vmem:[#allocation1] sm:$0xff]
    %v93 = vld [vmem:[#allocation1 + $0x9] sm:$0xff]
    %94 = vrot.lane.b32.xlu0 %v92, 16
    %v95 = vpop.permute.xlu0 %94
    %96 = vrot.lane.b32.xlu0 %v93, 16
    %v97 = vpop.permute.xlu0 %96
    %vm98 = vcmask 130048
    %v99 = vsel %vm98, %v95, %v97
    %v102 = vsel %vm98, %v87, %v95
    %v103 = vsel %vm80, %v102, 0.0
    %v104 = vsel %vm81, %v99, 0.0
    %v105 = vmul.f32 %v78, 0.30780134
    %v106 = vmul.f32 %v79, 0.30780134
    %v109 = vrot.slane %v106, 7
    %vm110 = vcmask 1040384
    %v111 = vsel %vm110, %v105, %v109
    %vm112 = vcmask 1041409
    %v113 = vsel %vm112, %v105, %v109
    %v114 = vrot.slane %v113, 1
    %v117 = vadd.f32 %v51, %v111
    %v118 = vadd.f32 %v52, %v114
    %v119 = vmul.f32 %v103, 0.30780134
    %v120 = vmul.f32 %v104, 0.30780134
    %v123 = vrot.slane %v120, 7
    %v124 = vsel %vm110, %v119, %v123
    %v125 = vsel %vm112, %v119, %v123
    %v126 = vrot.slane %v125, 1
    %v129 = vadd.f32 %v117, %v124
    %v130 = vadd.f32 %v118, %v126
    %v131 = vmul.f32 %v129, 0.38439733
    %v132 = vmul.f32 %v130, 0.38439733
    %vm133 = vcmp.lt.s32.totalorder %v49, 15
    %vm134 = vcmp.lt.s32.totalorder %v50, 15
    %137 = vst [vmem:[#allocation1] ss:$9 sm:$0xff] %v129
    %s138 = scalar_lea.vmem [#allocation1], 1
    %139 = vst [vmem:[%s138] ss:$9 sm:$0xff] %v130
    %v140 = vld [vmem:[#allocation1] sm:$0xff]
    %v141 = vld [vmem:[#allocation1 + $0x9] sm:$0xff]
    %142 = vrot.lane.b32.xlu0 %v140, 127
    %v143 = vpop.permute.xlu0 %142
    %144 = vrot.lane.b32.xlu0 %v141, 127
    %v145 = vpop.permute.xlu0 %144
    %vm146 = vcmask 1039360
    %v147 = vsel %vm146, %v143, %v145
    %150 = vst [vmem:[#allocation1] ss:$9 sm:$0xff] %v129
    %s151 = scalar_lea.vmem [#allocation1], 1
    %152 = vst [vmem:[%s151] ss:$9 sm:$0xff] %v130
    %v153 = vld [vmem:[#allocation1] sm:$0xff]
    %154 = vrot.lane.b32.xlu0 %v153, 127
    %v155 = vpop.permute.xlu0 %154
    %v157 = vsel %vm146, %v145, %v155
    %v158 = vsel %vm133, %v147, 0.0
    %v159 = vsel %vm134, %v157, 0.0
    %vm160 = vcmp.ge.s32.totalorder %v49, 1
    %vm161 = vcmp.ge.s32.totalorder %v50, 1
    %162 = vst [vmem:[#allocation1] ss:$9 sm:$0xff] %v129
    %s163 = scalar_lea.vmem [#allocation1], 1
    %164 = vst [vmem:[%s163] ss:$9 sm:$0xff] %v130
    %v165 = vld [vmem:[#allocation1 + $0x9] sm:$0xff]
    %166 = vrot.lane.b32.xlu0 %v165, 1
    %v167 = vpop.permute.xlu0 %166
    %169 = vst [vmem:[#allocation1] ss:$9 sm:$0xff] %v129
    %s170 = scalar_lea.vmem [#allocation1], 1
    %171 = vst [vmem:[%s170] ss:$9 sm:$0xff] %v130
    %v172 = vld [vmem:[#allocation1] sm:$0xff]
    %v173 = vld [vmem:[#allocation1 + $0x9] sm:$0xff]
    %174 = vrot.lane.b32.xlu0 %v172, 1
    %v175 = vpop.permute.xlu0 %174
    %176 = vrot.lane.b32.xlu0 %v173, 1
    %v177 = vpop.permute.xlu0 %176
    %vm178 = vcmask 7168
    %v179 = vsel %vm178, %v175, %v177
    %v182 = vsel %vm178, %v167, %v175
    %v183 = vsel %vm160, %v182, 0.0
    %v184 = vsel %vm161, %v179, 0.0
    %v185 = vmul.f32 %v158, 0.30780134
    %v186 = vmul.f32 %v159, 0.30780134
    %v189 = vrot.slane %v186, 7
    %v190 = vsel %vm110, %v185, %v189
    %v191 = vsel %vm112, %v185, %v189
    %v192 = vrot.slane %v191, 1
    %v195 = vadd.f32 %v131, %v190
    %v196 = vadd.f32 %v132, %v192
    %v197 = vmul.f32 %v183, 0.30780134
    %v198 = vmul.f32 %v184, 0.30780134
    %v201 = vrot.slane %v198, 7
    %v202 = vsel %vm110, %v197, %v201
    %v203 = vsel %vm112, %v197, %v201
    %v204 = vrot.slane %v203, 1
    %v207 = vadd.f32 %v195, %v202
    %v208 = vadd.f32 %v196, %v204
    %v209 = vmul.f32 %v22, 0.33333334
    %v210 = vmul.f32 %v23, 0.33333334
    %v211 = vsub.f32 %v209, %v207
    %v212 = vsub.f32 %v210, %v208
    %215 = vst [vmem:[#allocation1] ss:$2 sm:$0xff] %v211
    %s216 = scalar_lea.vmem [#allocation1], 1
    %217 = vst [vmem:[%s216] ss:$2 sm:$0xff] %v212
    %v218 = vld [vmem:[#allocation1] sm:$0xff]
    %220 = vst [vmem:[#allocation2] sm:$0xf] %v218
    // Predicated region
    $region6: #{tpu_custom_call.1} parent=1 // pred_check
      _
    $region7: #{tpu_custom_call.1} parent=1 // pred_check_branch
      %222 = sbr.rel (0) target = $region9
    $region8: #{tpu_custom_call.1} parent=1 // pred_region
      %224 = vsyncadd [#allocation3], 0
      %s226 = sshll.u32 [#allocation2], 4
      %s227 = int_to_ptr.vmem [resolvable:$true] %s226
      %s228 = sshll.u32 %s1, 4
      %s229 = int_to_ptr.hbm [resolvable:$true] %s228
      %231 = dma.vmem_to_hbm [thread:$0]  %s227, 64, %s229, [#allocation3]
    $region9: #{tpu_custom_call.1} parent=1 // pred_fallthru
      _
    // Predicated region
    $region10: #{tpu_custom_call.1} parent=1 // pred_check
      _
    $region11: #{tpu_custom_call.1} parent=1 // pred_check_branch
      %233 = sbr.rel (0) target = $region13
    $region12: #{tpu_custom_call.1} parent=1 // pred_region
      %235 = dma.done [#allocation3], 64
    $region13: #{tpu_custom_call.1} parent=1 // pred_fallthru
      _
    %236 = vsyncpa [#allocation3], 1

</llo_original>
